<compile_context>
chip_gen: v5e
topology: v5e:2x2
jax: 0.10.0
libtpu: 0.0.40
codegen_flags: <defaults>
</compile_context>

<pallas_src>
import functools

import jax
import jax.numpy as jnp
from jax.experimental import pallas as pl
from jax.experimental.pallas import tpu as pltpu


def gcn_model_kernel(a_ref, x_ref, w1_ref, b1_ref, w2_ref, b2_ref, o_ref,
                     *, c_out, agg_first):
    # GCNConv: A_norm @ X @ W1 + b1, ordered by whichever side is cheaper.
    if agg_first:
        # (A @ X) @ W1 : aggregation costs TM*N*F_in MACs (F_in <= H case).
        ax = jnp.dot(a_ref[...], x_ref[...], preferred_element_type=jnp.float32)
        h = jnp.dot(ax, w1_ref[...], preferred_element_type=jnp.float32) + b1_ref[...]
    else:
        # A @ (X @ W1) : better when F_in > H.
        xw = jnp.dot(x_ref[...], w1_ref[...], preferred_element_type=jnp.float32)
        h = jnp.dot(a_ref[...], xw, preferred_element_type=jnp.float32) + b1_ref[...]

    # ReLU
    h = jnp.maximum(h, 0.0)

    # Linear (classes zero-padded to a lane-dense width C_pad).
    z = jnp.dot(h, w2_ref[...], preferred_element_type=jnp.float32) + b2_ref[...]

    # log_softmax over the real classes only: mask padded lanes with -inf
    # (no slicing -> no extra VMEM copy, single unmasked XLU reduce).
    col = jax.lax.broadcasted_iota(jnp.int32, z.shape, 1)
    z_m = jnp.where(col < c_out, z, -jnp.inf)
    m = jnp.max(z_m, axis=-1, keepdims=True)
    lse = jnp.log(jnp.sum(jnp.exp(z_m - m), axis=-1, keepdims=True)) + m

    # Lane-dense full-tile store; padded lanes hold garbage and are sliced off
    # in the wrapper.
    o_ref[...] = (z - lse).astype(o_ref.dtype)


def simple_model02_forward(a_norm, x, w1, b1, w2, b2):
    n, f_in = x.shape
    h_dim = w1.shape[1]
    c_out = w2.shape[1]
    c_pad = ((c_out + 127) // 128) * 128  # lane-dense output width

    # Zero-pad the classifier to the lane-dense width.
    w2p = jnp.zeros((h_dim, c_pad), w2.dtype).at[:, :c_out].set(w2)
    b2p = jnp.zeros((1, c_pad), b2.dtype).at[:, :c_out].set(b2)

    # Row-tile over the adjacency.  Small graphs: one full-array tile.
    # Larger graphs: 256-row tiles keep double-buffered A tiles within the
    # v5e 16 MiB / v6e+v7x 32 MiB scoped VMEM defaults.
    tm = n if n <= 256 else 256
    grid = (pl.cdiv(n, tm),)

    kernel = functools.partial(
        gcn_model_kernel, c_out=c_out, agg_first=(f_in <= h_dim))

    out_padded = pl.pallas_call(
        kernel,
        out_shape=jax.ShapeDtypeStruct((n, c_pad), jnp.float32),
        grid=grid,
        in_specs=[
            pl.BlockSpec((tm, n), lambda i: (i, 0)),       # a_norm row tile
            pl.BlockSpec((n, f_in), lambda i: (0, 0)),     # x (resident)
            pl.BlockSpec((f_in, h_dim), lambda i: (0, 0)), # w1
            pl.BlockSpec((1, h_dim), lambda i: (0, 0)),    # b1
            pl.BlockSpec((h_dim, c_pad), lambda i: (0, 0)),# w2 (padded)
            pl.BlockSpec((1, c_pad), lambda i: (0, 0)),    # b2 (padded)
        ],
        out_specs=pl.BlockSpec((tm, c_pad), lambda i: (i, 0)),
        compiler_params=pltpu.CompilerParams(
            dimension_semantics=("parallel",),   # v7x: split row tiles across TCs
            vmem_limit_bytes=32 * 1024 * 1024,
        ),
    )(a_norm, x, w1, b1, w2p, b2p)

    return out_padded[:, :c_out]


def normalize_adjacency(adj):
    """PyG-style GCN normalization: D^{-1/2} (A + I) D^{-1/2}."""
    n = adj.shape[0]
    a_hat = adj + jnp.eye(n, dtype=adj.dtype)
    deg = jnp.sum(a_hat, axis=1)
    d_inv_sqrt = jnp.where(deg > 0, 1.0 / jnp.sqrt(deg), 0.0)
    return a_hat * d_inv_sqrt[:, None] * d_inv_sqrt[None, :]


def reference_forward(a_norm, x, w1, b1, w2, b2):
    h = a_norm @ (x @ w1) + b1
    h = jnp.maximum(h, 0.0)
    z = h @ w2 + b2
    return jax.nn.log_softmax(z, axis=-1)


if __name__ == "__main__":
    # Small shapes consistent with the module: N nodes, input_dim, hidden_dim, output_dim=2
    N, INPUT_DIM, HIDDEN_DIM, OUTPUT_DIM = 16, 8, 32, 2

    key = jax.random.PRNGKey(0)
    k_adj, k_x, k_w1, k_b1, k_w2, k_b2 = jax.random.split(key, 6)

    # Deterministic symmetric 0/1 adjacency (no self loops; GCN adds them).
    upper = (jax.random.uniform(k_adj, (N, N)) < 0.3).astype(jnp.float32)
    adj = jnp.triu(upper, k=1)
    adj = adj + adj.T

    a_norm = normalize_adjacency(adj)

    # Deterministic synthetic parameters.
    x = jax.random.normal(k_x, (N, INPUT_DIM), dtype=jnp.float32)
    w1 = jax.random.normal(k_w1, (INPUT_DIM, HIDDEN_DIM), dtype=jnp.float32) * 0.1
    b1 = jax.random.normal(k_b1, (1, HIDDEN_DIM), dtype=jnp.float32) * 0.1
    w2 = jax.random.normal(k_w2, (HIDDEN_DIM, OUTPUT_DIM), dtype=jnp.float32) * 0.1
    b2 = jax.random.normal(k_b2, (1, OUTPUT_DIM), dtype=jnp.float32) * 0.1

    out = simple_model02_forward(a_norm, x, w1, b1, w2, b2)
    out = jax.block_until_ready(out)

    ref = reference_forward(a_norm, x, w1, b1, w2, b2)
    assert out.shape == (N, OUTPUT_DIM)
    assert jnp.allclose(out, ref, atol=1e-5, rtol=1e-5), "mismatch vs reference"

    print("KERNEL_OK")
</pallas_src>

<mosaic_0001>
module attributes {stable_mosaic.version = 11 : i64} {
  func.func @gcn_model_kernel(%arg0: i32, %arg1: memref<16x16xf32, #tpu.memory_space<vmem>>, %arg2: memref<16x8xf32, #tpu.memory_space<vmem>>, %arg3: memref<8x32xf32, #tpu.memory_space<vmem>>, %arg4: memref<1x32xf32, #tpu.memory_space<vmem>>, %arg5: memref<32x128xf32, #tpu.memory_space<vmem>>, %arg6: memref<1x128xf32, #tpu.memory_space<vmem>>, %arg7: memref<16x128xf32, #tpu.memory_space<vmem>>) attributes {dimension_semantics = [#tpu.dimension_semantics<parallel>], iteration_bounds = array<i64: 1>, scalar_prefetch = 0 : i64, scratch_operands = 0 : i64, tpu.core_type = #tpu.core_type<tc>, window_params = [{transform_indices = @transform_0, window_bounds = array<i64: 16, 16>}, {pipeline_mode = #tpu.pipeline_mode<synchronous>, transform_indices = @transform_1, window_bounds = array<i64: 16, 8>}, {pipeline_mode = #tpu.pipeline_mode<synchronous>, transform_indices = @transform_2, window_bounds = array<i64: 8, 32>}, {pipeline_mode = #tpu.pipeline_mode<synchronous>, transform_indices = @transform_3, window_bounds = array<i64: 1, 32>}, {pipeline_mode = #tpu.pipeline_mode<synchronous>, transform_indices = @transform_4, window_bounds = array<i64: 32, 128>}, {pipeline_mode = #tpu.pipeline_mode<synchronous>, transform_indices = @transform_5, window_bounds = array<i64: 1, 128>}, {transform_indices = @transform_6, window_bounds = array<i64: 16, 128>}]} {
    %c0 = arith.constant 0 : index
    %c0_0 = arith.constant 0 : index
    %0 = vector.load %arg1[%c0, %c0_0] : memref<16x16xf32, #tpu.memory_space<vmem>>, vector<16x16xf32>
    %c0_1 = arith.constant 0 : index
    %c0_2 = arith.constant 0 : index
    %1 = vector.load %arg2[%c0_1, %c0_2] : memref<16x8xf32, #tpu.memory_space<vmem>>, vector<16x8xf32>
    %cst = arith.constant dense<0.000000e+00> : vector<16x8xf32>
    %2 = tpu.matmul %0, %1, %cst {dimension_numbers = #tpu.dot_dimension_numbers<[1], [0], [0], [1], [0, 0, 1, 1], [], []>} : vector<16x16xf32>, vector<16x8xf32>, vector<16x8xf32> -> vector<16x8xf32>
    %c0_3 = arith.constant 0 : index
    %c0_4 = arith.constant 0 : index
    %3 = vector.load %arg3[%c0_3, %c0_4] : memref<8x32xf32, #tpu.memory_space<vmem>>, vector<8x32xf32>
    %cst_5 = arith.constant dense<0.000000e+00> : vector<16x32xf32>
    %4 = tpu.matmul %2, %3, %cst_5 {dimension_numbers = #tpu.dot_dimension_numbers<[1], [0], [0], [1], [0, 0, 1, 1], [], []>} : vector<16x8xf32>, vector<8x32xf32>, vector<16x32xf32> -> vector<16x32xf32>
    %c0_6 = arith.constant 0 : index
    %c0_7 = arith.constant 0 : index
    %5 = vector.load %arg4[%c0_6, %c0_7] : memref<1x32xf32, #tpu.memory_space<vmem>>, vector<1x32xf32>
    %6 = vector.broadcast %5 : vector<1x32xf32> to vector<16x32xf32>
    %7 = arith.addf %4, %6 : vector<16x32xf32>
    %cst_8 = arith.constant 0.000000e+00 : f32
    %8 = vector.broadcast %cst_8 : f32 to vector<16x32xf32>
    %9 = arith.maximumf %7, %8 : vector<16x32xf32>
    %c0_9 = arith.constant 0 : index
    %c0_10 = arith.constant 0 : index
    %10 = vector.load %arg5[%c0_9, %c0_10] : memref<32x128xf32, #tpu.memory_space<vmem>>, vector<32x128xf32>
    %cst_11 = arith.constant dense<0.000000e+00> : vector<16x128xf32>
    %11 = tpu.matmul %9, %10, %cst_11 {dimension_numbers = #tpu.dot_dimension_numbers<[1], [0], [0], [1], [0, 0, 1, 1], [], []>} : vector<16x32xf32>, vector<32x128xf32>, vector<16x128xf32> -> vector<16x128xf32>
    %c0_12 = arith.constant 0 : index
    %c0_13 = arith.constant 0 : index
    %12 = vector.load %arg6[%c0_12, %c0_13] : memref<1x128xf32, #tpu.memory_space<vmem>>, vector<1x128xf32>
    %13 = vector.broadcast %12 : vector<1x128xf32> to vector<16x128xf32>
    %14 = arith.addf %11, %13 : vector<16x128xf32>
    %15 = tpu.iota {dimensions = array<i32: 1>} : vector<16x128xi32>
    %c2_i32 = arith.constant 2 : i32
    %16 = vector.broadcast %c2_i32 : i32 to vector<16x128xi32>
    %17 = arith.cmpi slt, %15, %16 : vector<16x128xi32>
    %cst_14 = arith.constant 0xFF800000 : f32
    %18 = vector.broadcast %cst_14 : f32 to vector<16x128xf32>
    %19 = arith.select %17, %14, %18 : vector<16x128xi1>, vector<16x128xf32>
    %cst_15 = arith.constant dense<0xFF800000> : vector<16xf32>
    %20 = vector.multi_reduction <maximumf>, %19, %cst_15 [1] : vector<16x128xf32> to vector<16xf32>
    %21 = vector.shape_cast %20 : vector<16xf32> to vector<16x1xf32>
    %22 = vector.broadcast %21 : vector<16x1xf32> to vector<16x128xf32>
    %23 = arith.subf %19, %22 : vector<16x128xf32>
    %24 = math.exp %23 : vector<16x128xf32>
    %cst_16 = arith.constant dense<0.000000e+00> : vector<16xf32>
    %25 = vector.multi_reduction <add>, %24, %cst_16 [1] : vector<16x128xf32> to vector<16xf32>
    %26 = vector.shape_cast %25 : vector<16xf32> to vector<16x1xf32>
    %27 = math.log %26 : vector<16x1xf32>
    %28 = arith.addf %27, %21 : vector<16x1xf32>
    %29 = vector.broadcast %28 : vector<16x1xf32> to vector<16x128xf32>
    %30 = arith.subf %14, %29 : vector<16x128xf32>
    %c0_17 = arith.constant 0 : index
    %c0_18 = arith.constant 0 : index
    %31 = vector.load %arg7[%c0_17, %c0_18] : memref<16x128xf32, #tpu.memory_space<vmem>>, vector<16x128xf32>
    tpu.vector_store %arg7[%c0_17, %c0_18], %30 {strides = array<i32>} : memref<16x128xf32, #tpu.memory_space<vmem>>, vector<16x128xf32>,
    return
  }
  func.func @transform_0(%arg0: i32) -> (i32, i32) {
    %c0_i32 = arith.constant 0 : i32
    %c0_i32_0 = arith.constant 0 : i32
    return %arg0, %c0_i32 : i32, i32
  }
  func.func @transform_1(%arg0: i32) -> (i32, i32) {
    %c0_i32 = arith.constant 0 : i32
    %c0_i32_0 = arith.constant 0 : i32
    %c0_i32_1 = arith.constant 0 : i32
    return %c0_i32, %c0_i32_0 : i32, i32
  }
  func.func @transform_2(%arg0: i32) -> (i32, i32) {
    %c0_i32 = arith.constant 0 : i32
    %c0_i32_0 = arith.constant 0 : i32
    %c0_i32_1 = arith.constant 0 : i32
    return %c0_i32, %c0_i32_0 : i32, i32
  }
  func.func @transform_3(%arg0: i32) -> (i32, i32) {
    %c0_i32 = arith.constant 0 : i32
    %c0_i32_0 = arith.constant 0 : i32
    %c0_i32_1 = arith.constant 0 : i32
    return %c0_i32, %c0_i32_0 : i32, i32
  }
  func.func @transform_4(%arg0: i32) -> (i32, i32) {
    %c0_i32 = arith.constant 0 : i32
    %c0_i32_0 = arith.constant 0 : i32
    %c0_i32_1 = arith.constant 0 : i32
    return %c0_i32, %c0_i32_0 : i32, i32
  }
  func.func @transform_5(%arg0: i32) -> (i32, i32) {
    %c0_i32 = arith.constant 0 : i32
    %c0_i32_0 = arith.constant 0 : i32
    %c0_i32_1 = arith.constant 0 : i32
    return %c0_i32, %c0_i32_0 : i32, i32
  }
  func.func @transform_6(%arg0: i32) -> (i32, i32) {
    %c0_i32 = arith.constant 0 : i32
    %c0_i32_0 = arith.constant 0 : i32
    return %arg0, %c0_i32 : i32, i32
  }
}

</mosaic_0001>

<llo_original>
// kernel: tpu_custom_call.1
$region0: #{tpu_custom_call.1}
  #allocation0 [shape = 'u32[]', space=smem, size = 0x4, offset = 0x4, fixed_abs, tag = 'smem constant byte address 0x4 - core index']
  #allocation1 [shape = 'u32[72,128]{1,0:T(1,128)}', space=vmem, size = 0x9000, scoped, tag = 'internal scratch']
  %s0 = inlined_call_operand.vmem [shape: f32[16,16], index: 0, kind: input, shape index: {}]
  %s1 = inlined_call_operand.vmem [shape: f32[16,8], index: 1, kind: input, shape index: {}]
  %s2 = inlined_call_operand.vmem [shape: f32[8,32], index: 2, kind: input, shape index: {}]
  %s3 = inlined_call_operand.vmem [shape: f32[1,32], index: 3, kind: input, shape index: {}]
  %s4 = inlined_call_operand.hbm [shape: f32[32,128], index: 4, kind: input, shape index: {}]
  %s5 = inlined_call_operand.vmem [shape: f32[1,128], index: 5, kind: input, shape index: {}]
  %s6 = inlined_call_operand.hbm [shape: f32[16,128], index: 6, kind: output, shape index: {}]
  %s7 = sld [smem:[#allocation0]]
  $region38: #{tpu_custom_call.1} parent=0
    _
  %s9 = ssub.s32 1, %s7
  %s10 = scalar_select 0, %s9, %s7
  $region1: #{tpu_custom_call.1} parent=0
    #allocation2 [shape = 'u8[16384]{0}', space=vmem, size = 0x4000, scoped, tag = 'input window, operand 4, single buffered']
    #allocation3 [shape = 's32[1]{0}', space=sflag, size = 0x4, scoped, tag = 'scoped memory for tpu_custom_call.1']
    #allocation4 [shape = 's32[1]{0}', space=sflag, size = 0x4, scoped, tag = 'scoped memory for tpu_custom_call.1']
    #allocation5 [shape = 'u8[8192]{0}', space=vmem, size = 0x2000, scoped, tag = 'output window, operand 0, single buffered']
    %11 = vsyncpa [#allocation3], 0
    %12 = vsyncpa [#allocation4], 0
    // Predicated region
    $region2: #{tpu_custom_call.1} parent=1 // pred_check
      _
    $region3: #{tpu_custom_call.1} parent=1 // pred_check_branch
      %14 = sbr.rel (0) target = $region5
    $region4: #{tpu_custom_call.1} parent=1 // pred_region
      _
    $region5: #{tpu_custom_call.1} parent=1 // pred_fallthru
      _
    // Predicated region
    $region6: #{tpu_custom_call.1} parent=1 // pred_check
      _
    $region7: #{tpu_custom_call.1} parent=1 // pred_check_branch
      %16 = sbr.rel (0) target = $region9
    $region8: #{tpu_custom_call.1} parent=1 // pred_region
      _
    $region9: #{tpu_custom_call.1} parent=1 // pred_fallthru
      _
    // Predicated region
    $region10: #{tpu_custom_call.1} parent=1 // pred_check
      _
    $region11: #{tpu_custom_call.1} parent=1 // pred_check_branch
      %18 = sbr.rel (0) target = $region13
    $region12: #{tpu_custom_call.1} parent=1 // pred_region
      _
    $region13: #{tpu_custom_call.1} parent=1 // pred_fallthru
      _
    // Predicated region
    $region14: #{tpu_custom_call.1} parent=1 // pred_check
      _
    $region15: #{tpu_custom_call.1} parent=1 // pred_check_branch
      %20 = sbr.rel (0) target = $region17
    $region16: #{tpu_custom_call.1} parent=1 // pred_region
      _
    $region17: #{tpu_custom_call.1} parent=1 // pred_fallthru
      _
    // Predicated region
    $region18: #{tpu_custom_call.1} parent=1 // pred_check
      _
    $region19: #{tpu_custom_call.1} parent=1 // pred_check_branch
      %22 = sbr.rel (0) target = $region21
    $region20: #{tpu_custom_call.1} parent=1 // pred_region
      %24 = vsyncadd [#allocation3], 0
      %s25 = sshll.u32 %s4, 4
      %s26 = int_to_ptr.hbm [resolvable:$true] %s25
      %s27 = sshll.u32 [#allocation2], 4
      %s28 = int_to_ptr.vmem [resolvable:$true] %s27
      %33 = dma.hbm_to_vmem [thread:$0]  %s26, 512, %s28, [#allocation3], 128, 128, 8
    $region21: #{tpu_custom_call.1} parent=1 // pred_fallthru
      _
    // Predicated region
    $region22: #{tpu_custom_call.1} parent=1 // pred_check
      _
    $region23: #{tpu_custom_call.1} parent=1 // pred_check_branch
      %35 = sbr.rel (0) target = $region25
    $region24: #{tpu_custom_call.1} parent=1 // pred_region
      _
    $region25: #{tpu_custom_call.1} parent=1 // pred_fallthru
      _
    // Predicated region
    $region26: #{tpu_custom_call.1} parent=1 // pred_check
      _
    $region27: #{tpu_custom_call.1} parent=1 // pred_check_branch
      %37 = sbr.rel (0) target = $region29
    $region28: #{tpu_custom_call.1} parent=1 // pred_region
      %39 = dma.done [#allocation3], 512
    $region29: #{tpu_custom_call.1} parent=1 // pred_fallthru
      _
    %v40 = vld [vmem:[%s0] sm:$0xff]
    %v41 = vld [vmem:[%s0 + $0x8] sm:$0xff]
    %v42 = vld [vmem:[%s1] sm:$0xff]
    %v43 = vld [vmem:[%s1 + $0x8] sm:$0xff]
    %vm44 = vcmask 130048
    %v46 = vsel %vm44, %v40, 0
    %v49 = vsel %vm44, %v41, 0
    %51 = vmatpush.msra.mxu0 0.0
    %52 = vmatpush.msra.mxu0 0.0
    %53 = vmatpush.msra.mxu0 0.0
    %54 = vmatpush.msra.mxu0 0.0
    %55 = vmatpush.msra.mxu0 0.0
    %56 = vmatpush.msra.mxu0 0.0
    %57 = vmatpush.msra.mxu0 0.0
    %58 = vmatpush.msra.mxu0 0.0
    %59 = vmatpush.msra.mxu0 0.0
    %60 = vmatpush.msra.mxu0 0.0
    %61 = vmatpush.msra.mxu0 0.0
    %62 = vmatpush.msra.mxu0 0.0
    %63 = vmatpush.msra.mxu0 0.0
    %64 = vmatpush.msra.mxu0 0.0
    %65 = vmatpush.msra.mxu0 %v43
    %66 = vmatpush.msra.mxu0 %v42
    %67 = vmatmul.f32.gmra.mxu0 %v46
    %v68 = vpop.f32.mrf.mxu0
    %v69 = vadd.f32 0.0, %v68
    %70 = vmatmul.f32.gmra.mxu0 %v49
    %v71 = vpop.f32.mrf.mxu0
    %v72 = vadd.f32 0.0, %v71
    %73 = vdwg.mxu0
    %v74 = vld [vmem:[%s2] sm:$0xff]
    %v75 = vld [vmem:[%s3] sm:$0x1]
    %v77 = vperm.slane %v75, 0
    %vm79 = vcmask 64512
    %v81 = vsel %vm79, %v69, 0
    %v84 = vsel %vm79, %v72, 0
    %86 = vmatpush.msra.mxu0 0.0
    %87 = vmatpush.msra.mxu0 0.0
    %88 = vmatpush.msra.mxu0 0.0
    %89 = vmatpush.msra.mxu0 0.0
    %90 = vmatpush.msra.mxu0 0.0
    %91 = vmatpush.msra.mxu0 0.0
    %92 = vmatpush.msra.mxu0 0.0
    %93 = vmatpush.msra.mxu0 0.0
    %94 = vmatpush.msra.mxu0 0.0
    %95 = vmatpush.msra.mxu0 0.0
    %96 = vmatpush.msra.mxu0 0.0
    %97 = vmatpush.msra.mxu0 0.0
    %98 = vmatpush.msra.mxu0 0.0
    %99 = vmatpush.msra.mxu0 0.0
    %100 = vmatpush.msra.mxu0 0.0
    %101 = vmatpush.msra.mxu0 %v74
    %102 = vmatmul.f32.gmra.mxu0 %v81
    %v103 = vpop.f32.mrf.mxu0
    %v104 = vadd.f32 %v77, %v103
    %105 = vmatmul.f32.gmra.mxu0 %v84
    %v106 = vpop.f32.mrf.mxu0
    %v107 = vadd.f32 %v77, %v106
    %108 = vdwg.mxu0
    %v109 = vmax.f32 %v104, 0.0
    %v110 = vmax.f32 %v107, 0.0
    %v111 = vld [vmem:[#allocation2] sm:$0xff]
    %v112 = vld [vmem:[#allocation2 + $0x8] sm:$0xff]
    %v113 = vld [vmem:[#allocation2 + $0x10] sm:$0xff]
    %v114 = vld [vmem:[#allocation2 + $0x18] sm:$0xff]
    %v115 = vld [vmem:[%s5] sm:$0x1]
    %v117 = vperm.slane %v115, 0
    %vm119 = vcmask 261120
    %v121 = vsel %vm119, %v109, 0
    %v124 = vsel %vm119, %v110, 0
    %126 = vmatpush.msra.mxu0 0.0
    %127 = vmatpush.msra.mxu0 0.0
    %128 = vmatpush.msra.mxu0 0.0
    %129 = vmatpush.msra.mxu0 0.0
    %130 = vmatpush.msra.mxu0 0.0
    %131 = vmatpush.msra.mxu0 0.0
    %132 = vmatpush.msra.mxu0 0.0
    %133 = vmatpush.msra.mxu0 0.0
    %134 = vmatpush.msra.mxu0 0.0
    %135 = vmatpush.msra.mxu0 0.0
    %136 = vmatpush.msra.mxu0 0.0
    %137 = vmatpush.msra.mxu0 0.0
    %138 = vmatpush.msra.mxu0 %v114
    %139 = vmatpush.msra.mxu0 %v113
    %140 = vmatpush.msra.mxu0 %v112
    %141 = vmatpush.msra.mxu0 %v111
    %142 = vmatmul.f32.gmra.mxu0 %v121
    %v143 = vpop.f32.mrf.mxu0
    %v144 = vadd.f32 %v117, %v143
    %145 = vmatmul.f32.gmra.mxu0 %v124
    %v146 = vpop.f32.mrf.mxu0
    %v147 = vadd.f32 %v117, %v146
    %148 = vdwg.mxu0
    %v149 = vlaneseq
    %v150 = vand.u32 %v149, 127
    %vm151 = vcmp.lt.s32.totalorder %v150, 2
    %v152 = vsel %vm151, %v144, -inf
    %v153 = vsel %vm151, %v147, -inf
    %154 = vmax.xlane.f32.xlu0 %v152
    %v155 = vpop.xlane.xlu0 %154
    %156 = vmax.xlane.f32.xlu0 %v153
    %v157 = vpop.xlane.xlu0 %156
    %v158 = vsub.f32 %v152, %v155
    %v159 = vsub.f32 %v153, %v157
    %v160 = vmul.f32 %v158, 1.442695
    %v161 = vpow.pop %v160
    %v162 = vmul.f32 %v159, 1.442695
    %v163 = vpow.pop %v162
    %164 = vadd.xlane.f32.xlu0 %v161
    %v165 = vpop.xlane.xlu0 %164
    %166 = vadd.xlane.f32.xlu0 %v163
    %v167 = vpop.xlane.xlu0 %166
    %v168 = vlog2.pop %v165
    %v169 = vmul.f32 %v168, 0.6931472
    %v170 = vlog2.pop %v167
    %v171 = vmul.f32 %v170, 0.6931472
    %v172 = vadd.f32 %v169, %v155
    %v173 = vadd.f32 %v171, %v157
    %v174 = vsub.f32 %v144, %v172
    %v175 = vsub.f32 %v147, %v173
    %176 = vst [vmem:[#allocation5] sm:$0xff] %v174
    %177 = vst [vmem:[#allocation5 + $0x8] sm:$0xff] %v175
    // Predicated region
    $region30: #{tpu_custom_call.1} parent=1 // pred_check
      _
    $region31: #{tpu_custom_call.1} parent=1 // pred_check_branch
      %179 = sbr.rel (0) target = $region33
    $region32: #{tpu_custom_call.1} parent=1 // pred_region
      %181 = vsyncadd [#allocation4], 0
      %s182 = sshll.u32 [#allocation5], 4
      %s183 = int_to_ptr.vmem [resolvable:$true] %s182
      %s184 = sshll.u32 %s6, 4
      %s185 = int_to_ptr.hbm [resolvable:$true] %s184
      %190 = dma.vmem_to_hbm [thread:$0]  %s183, 256, %s185, [#allocation4], 128, 128, 8
    $region33: #{tpu_custom_call.1} parent=1 // pred_fallthru
      _
    // Predicated region
    $region34: #{tpu_custom_call.1} parent=1 // pred_check
      _
    $region35: #{tpu_custom_call.1} parent=1 // pred_check_branch
      %192 = sbr.rel (0) target = $region37
    $region36: #{tpu_custom_call.1} parent=1 // pred_region
      %194 = dma.done [#allocation4], 256
    $region37: #{tpu_custom_call.1} parent=1 // pred_fallthru
      _
    %195 = vsyncpa [#allocation3], 1
    %196 = vsyncpa [#allocation4], 1

</llo_original>
